<compile_context>
chip_gen: v7x
topology: tpu7x:2x2x1
jax: 0.10.0
libtpu: 0.0.40
codegen_flags: <defaults>
</compile_context>

<pallas_src>
import numpy as np
import jax
import jax.numpy as jnp
from jax import lax
from jax.experimental import pallas as pl
from jax.experimental.pallas import tpu as pltpu

# ------------------------- static problem sizes -------------------------
B, C, S = 2, 3, 16          # batch, image channels, spatial_size
K = 6                       # spatialsize_convolution
H = W_ = S - K + 1          # n_patches_hw = 11
HW = H * W_                 # 121
P = C * K * K               # 108  (unfolded patch dim)
CW = P                      # whitening operator output channels (square whitening)
COUT = 64                   # conv_weight output channels (# dictionary patches)
POOL = 3                    # spatialsize_avg_pooling
STRIDE = 2                  # stride_avg_pooling
BIAS = 1.0                  # shrink bias
OH = OW = -(-(H - POOL) // STRIDE) + 1   # ceil_mode avg-pool output size = 5
OHW = OH * OW                            # 25

PAD = 128                   # padded contraction / whitened-channel dim (lane width)
CAT = 2 * COUT              # 128 lanes: [relu(-out) | relu(out)]
M_ROWS = B * HW             # 242  (batch folded into sublane axis)
MO_ROWS = B * OHW           # 50   (pooled rows, both batch elements)


# ------------------------- glue: F.unfold equivalent -------------------------
def unfold_patches(x, k):
    """x: (B, C, S, S) NCHW -> (B, HW, C*k*k), matching F.unfold's column ordering."""
    b, c, s, _ = x.shape
    ho = s - k + 1
    cols = []
    for di in range(k):
        for dj in range(k):
            cols.append(x[:, :, di:di + ho, dj:dj + ho])      # (B, C, Ho, Wo)
    p = jnp.stack(cols, axis=2)                               # (B, C, k*k, Ho, Wo)
    p = p.reshape(b, c * k * k, ho * ho)                      # (B, P, HW)
    return jnp.transpose(p, (0, 2, 1))                        # (B, HW, P)


# ------------------------- pooling matrix (ceil-mode avg_pool2d, block-diag over batch) ----
def _build_pool_matrix():
    """(B*OHW, B*HW) block-diagonal matrix; row o holds 1/window_count at that
    batch element's window spatial positions."""
    pm1 = np.zeros((OHW, HW), np.float32)
    for oh in range(OH):
        h0 = oh * STRIDE
        h1 = min(h0 + POOL, H)
        for ow in range(OW):
            w0 = ow * STRIDE
            w1 = min(w0 + POOL, W_)
            inv = 1.0 / float((h1 - h0) * (w1 - w0))
            o = oh * OW + ow
            for h in range(h0, h1):
                pm1[o, h * W_ + w0:h * W_ + w1] = inv
    pm = np.zeros((MO_ROWS, M_ROWS), np.float32)
    for b in range(B):
        pm[b * OHW:(b + 1) * OHW, b * HW:(b + 1) * HW] = pm1
    return jnp.asarray(pm)


# ------------------------- fused kernel (single invocation, whole problem) -------------------------
def _fused_kernel(x_ref, ww_ref, wd_ref, pm_ref, o_ref):
    # x:  (B*HW, 128) f32 padded patches; lane P(=108) carries 1.0 (bias column)
    # ww: (128, 128) bf16 whitening weight, row P holds minus_whitened_patches_mean
    # wd: (128, 128) bf16 = [-W_t | W_t] dictionary weight
    # pm: (B*OHW, B*HW) f32 block-diagonal pooling matrix
    # o:  (B*OHW, 128) f32
    x = x_ref[...]

    # whitening 1x1 conv (+ bias folded into column P) — bf16 MXU operands, f32 accumulate
    y = jnp.dot(x.astype(jnp.bfloat16), ww_ref[...],
                preferred_element_type=jnp.float32)                     # (B*HW, 128)

    # L2 normalize over whitened channels (padded channels are exactly 0)
    ssq = jnp.sum(y * y, axis=1, keepdims=True)
    y = y * lax.rsqrt(ssq)

    # emulate torch .half(): round-to-nearest-even to 10 mantissa bits via int bit trick.
    # TODO(synk): downstream fp16 arithmetic (conv/shrink/relu/pool) is computed in f32/bf16 on
    #             TPU; fp16 subnormal/overflow corner cases are not reproduced bit-exactly.
    bits = pltpu.bitcast(y, jnp.int32)
    lsb = jnp.bitwise_and(jnp.right_shift(bits, 13), 1)
    bits = jnp.bitwise_and(bits + 4095 + lsb, jnp.int32(~0x1FFF))
    y = pltpu.bitcast(bits, jnp.float32)

    # dictionary conv against [-W | W]  ->  columns [0:64) = -out_raw, [64:128) = out_raw
    z = jnp.dot(y.astype(jnp.bfloat16), wd_ref[...],
                preferred_element_type=jnp.float32)                     # (B*HW, 128)
    z = z - jnp.clip(z, -BIAS, BIAS)            # shrink (odd) -> [-shrink(out) | shrink(out)]
    a = jnp.maximum(z, 0.0)                     # [relu(-out) | relu(out)]

    # ceil-mode avg_pool2d for both batch elements as one block-diagonal MXU matmul,
    # lane-dense 128-wide store (pool weights kept exact in f32).
    o_ref[...] = jnp.dot(pm_ref[...], a, preferred_element_type=jnp.float32)  # (B*OHW, 128)


# ------------------------- full forward -------------------------
def net_forward(x, conv_weight, whitening_operator, minus_whitened_patches_mean):
    # torch-convention params:
    #   conv_weight                 : (COUT, CW, 1, 1)
    #   whitening_operator          : (CW, P, 1, 1)
    #   minus_whitened_patches_mean : (CW,)
    w_white = jnp.transpose(whitening_operator[:, :, 0, 0])          # (P, CW)
    w_white = jnp.pad(w_white, ((0, PAD - P), (0, PAD - CW)))        # (128, 128)
    w_white = w_white.at[P, :CW].set(minus_whitened_patches_mean)    # bias folded into row P
    w_white = w_white.astype(jnp.bfloat16)

    w_dict = jnp.transpose(conv_weight[:, :, 0, 0])                  # (CW, COUT)
    w_dict = jnp.pad(w_dict, ((0, PAD - CW), (0, 0)))                # (128, 64)
    w_dict_cat = jnp.concatenate([-w_dict, w_dict], axis=1)          # (128, 128) = [-W | W]
    w_dict_cat = w_dict_cat.astype(jnp.bfloat16)

    pool_mat = _build_pool_matrix()                                  # (50, 242) f32

    patches = unfold_patches(x, K)                                   # (B, HW, P)
    patches = jnp.pad(patches, ((0, 0), (0, 0), (0, PAD - P)))       # (B, HW, 128)
    patches = patches.at[:, :, P].set(1.0)                           # bias column
    patches = patches.reshape(M_ROWS, PAD)                           # (242, 128) batch folded

    flops = (2 * M_ROWS * PAD * PAD            # whitening matmul
             + 2 * M_ROWS * PAD * CAT          # dictionary matmul
             + 2 * MO_ROWS * M_ROWS * CAT)     # pooling matmul
    bytes_accessed = (4 * M_ROWS * PAD + 2 * PAD * PAD + 2 * PAD * CAT
                      + 4 * MO_ROWS * M_ROWS + 4 * MO_ROWS * CAT)

    vmem_spec = pl.BlockSpec(memory_space=pltpu.MemorySpace.VMEM)
    out = pl.pallas_call(
        _fused_kernel,
        out_shape=jax.ShapeDtypeStruct((MO_ROWS, CAT), jnp.float32),
        in_specs=[vmem_spec, vmem_spec, vmem_spec, vmem_spec],
        out_specs=vmem_spec,
        cost_estimate=pl.CostEstimate(flops=flops, transcendentals=M_ROWS,
                                      bytes_accessed=bytes_accessed),
    )(patches, w_white, w_dict_cat, pool_mat)

    out = out.reshape(B, OHW, CAT)
    neg = out[:, :, :COUT]                                            # relu(-out) pooled
    pos = out[:, :, COUT:]                                            # relu(out)  pooled
    out1 = jnp.transpose(neg.reshape(B, OH, OW, COUT), (0, 3, 1, 2))  # NCHW
    out2 = jnp.transpose(pos.reshape(B, OH, OW, COUT), (0, 3, 1, 2))  # NCHW
    return out1, out2


net_forward_jit = jax.jit(net_forward)


# ------------------------- pure-JAX reference (sanity check) -------------------------
def reference_forward(x, conv_weight, whitening_operator, minus_whitened_patches_mean):
    w_white_t = jnp.transpose(whitening_operator[:, :, 0, 0])
    w_conv_t = jnp.transpose(conv_weight[:, :, 0, 0])
    b_white = minus_whitened_patches_mean.reshape(1, 1, CW)
    pm = unfold_patches(x, K)                                   # (B, HW, P)
    y = jnp.einsum('bnp,pc->bnc', pm, w_white_t) + b_white
    y = y / jnp.sqrt(jnp.sum(y * y, axis=-1, keepdims=True))
    y = y.astype(jnp.float16).astype(jnp.float32)
    z = jnp.einsum('bnc,co->bno', y, w_conv_t)
    z = z - jnp.clip(z, -BIAS, BIAS)
    neg = jnp.maximum(-z, 0.0).reshape(B, H, W_, COUT)
    pos = jnp.maximum(z, 0.0).reshape(B, H, W_, COUT)

    def pool(a):
        rows = []
        for oh in range(OH):
            h0, h1 = oh * STRIDE, min(oh * STRIDE + POOL, H)
            cols = []
            for ow in range(OW):
                w0, w1 = ow * STRIDE, min(ow * STRIDE + POOL, W_)
                cnt = (h1 - h0) * (w1 - w0)
                cols.append(a[:, h0:h1, w0:w1, :].sum(axis=(1, 2)) / cnt)
            rows.append(jnp.stack(cols, axis=1))
        return jnp.stack(rows, axis=1)                          # (B, OH, OW, COUT)

    return (jnp.transpose(pool(neg), (0, 3, 1, 2)),
            jnp.transpose(pool(pos), (0, 3, 1, 2)))


if __name__ == "__main__":
    key = jax.random.PRNGKey(0)
    kx, kw, kb, kc = jax.random.split(key, 4)
    x = jax.random.uniform(kx, (B, C, S, S), dtype=jnp.float32)
    whitening_operator = 0.1 * jax.random.normal(kw, (CW, P, 1, 1), dtype=jnp.float32)
    minus_whitened_patches_mean = 0.01 * jax.random.normal(kb, (CW,), dtype=jnp.float32)
    conv_weight = jax.random.normal(kc, (COUT, CW, 1, 1), dtype=jnp.float32)

    out1, out2 = net_forward_jit(x, conv_weight, whitening_operator,
                                 minus_whitened_patches_mean)
    out1 = jax.block_until_ready(out1)
    out2 = jax.block_until_ready(out2)

    ref1, ref2 = reference_forward(x, conv_weight, whitening_operator,
                                   minus_whitened_patches_mean)
    assert out1.shape == (B, COUT, OH, OW) and out2.shape == (B, COUT, OH, OW)
    assert out1.dtype == jnp.float32 and out2.dtype == jnp.float32
    np.testing.assert_allclose(np.asarray(out1), np.asarray(ref1), atol=5e-2, rtol=5e-2)
    np.testing.assert_allclose(np.asarray(out2), np.asarray(ref2), atol=5e-2, rtol=5e-2)

    print("KERNEL_OK")
</pallas_src>

<mosaic_0001>
module attributes {stable_mosaic.version = 11 : i64} {
  func.func @_fused_kernel(%arg0: memref<242x128xf32, #tpu.memory_space<vmem>>, %arg1: memref<128x128xbf16, #tpu.memory_space<vmem>>, %arg2: memref<128x128xbf16, #tpu.memory_space<vmem>>, %arg3: memref<50x242xf32, #tpu.memory_space<vmem>>, %arg4: memref<50x128xf32, #tpu.memory_space<vmem>>) attributes {dimension_semantics = [], scalar_prefetch = 0 : i64, scratch_operands = 0 : i64, tpu.core_type = #tpu.core_type<tc>} {
    %c0 = arith.constant 0 : index
    %c0_0 = arith.constant 0 : index
    %0 = vector.load %arg0[%c0, %c0_0] : memref<242x128xf32, #tpu.memory_space<vmem>>, vector<242x128xf32>
    %1 = arith.truncf %0 : vector<242x128xf32> to vector<242x128xbf16>
    %c0_1 = arith.constant 0 : index
    %c0_2 = arith.constant 0 : index
    %2 = vector.load %arg1[%c0_1, %c0_2] : memref<128x128xbf16, #tpu.memory_space<vmem>>, vector<128x128xbf16>
    %cst = arith.constant dense<0.000000e+00> : vector<242x128xf32>
    %3 = tpu.matmul %1, %2, %cst {dimension_numbers = #tpu.dot_dimension_numbers<[1], [0], [0], [1], [0, 0, 1, 1], [], []>} : vector<242x128xbf16>, vector<128x128xbf16>, vector<242x128xf32> -> vector<242x128xf32>
    %4 = arith.mulf %3, %3 : vector<242x128xf32>
    %cst_3 = arith.constant dense<0.000000e+00> : vector<242xf32>
    %5 = vector.multi_reduction <add>, %4, %cst_3 [1] : vector<242x128xf32> to vector<242xf32>
    %6 = vector.shape_cast %5 : vector<242xf32> to vector<242x1xf32>
    %7 = math.rsqrt %6 : vector<242x1xf32>
    %8 = vector.broadcast %7 : vector<242x1xf32> to vector<242x128xf32>
    %9 = arith.mulf %3, %8 : vector<242x128xf32>
    %10 = tpu.bitcast %9 : vector<242x128xf32> -> vector<242x128xi32>
    %c13_i32 = arith.constant 13 : i32
    %11 = vector.broadcast %c13_i32 : i32 to vector<242x128xi32>
    %12 = arith.shrsi %10, %11 : vector<242x128xi32>
    %c1_i32 = arith.constant 1 : i32
    %13 = vector.broadcast %c1_i32 : i32 to vector<242x128xi32>
    %14 = arith.andi %12, %13 : vector<242x128xi32>
    %c4095_i32 = arith.constant 4095 : i32
    %15 = vector.broadcast %c4095_i32 : i32 to vector<242x128xi32>
    %16 = arith.addi %10, %15 : vector<242x128xi32>
    %17 = arith.addi %16, %14 : vector<242x128xi32>
    %c-8192_i32 = arith.constant -8192 : i32
    %18 = vector.broadcast %c-8192_i32 : i32 to vector<242x128xi32>
    %19 = arith.andi %17, %18 : vector<242x128xi32>
    %20 = tpu.bitcast %19 : vector<242x128xi32> -> vector<242x128xf32>
    %21 = arith.truncf %20 : vector<242x128xf32> to vector<242x128xbf16>
    %c0_4 = arith.constant 0 : index
    %c0_5 = arith.constant 0 : index
    %22 = vector.load %arg2[%c0_4, %c0_5] : memref<128x128xbf16, #tpu.memory_space<vmem>>, vector<128x128xbf16>
    %cst_6 = arith.constant dense<0.000000e+00> : vector<242x128xf32>
    %23 = tpu.matmul %21, %22, %cst_6 {dimension_numbers = #tpu.dot_dimension_numbers<[1], [0], [0], [1], [0, 0, 1, 1], [], []>} : vector<242x128xbf16>, vector<128x128xbf16>, vector<242x128xf32> -> vector<242x128xf32>
    %cst_7 = arith.constant -1.000000e+00 : f32
    %cst_8 = arith.constant 1.000000e+00 : f32
    %24 = vector.broadcast %cst_7 : f32 to vector<242x128xf32>
    %25 = arith.maximumf %24, %23 : vector<242x128xf32>
    %26 = vector.broadcast %cst_8 : f32 to vector<242x128xf32>
    %27 = arith.minimumf %26, %25 : vector<242x128xf32>
    %28 = arith.subf %23, %27 : vector<242x128xf32>
    %cst_9 = arith.constant 0.000000e+00 : f32
    %29 = vector.broadcast %cst_9 : f32 to vector<242x128xf32>
    %30 = arith.maximumf %28, %29 : vector<242x128xf32>
    %c0_10 = arith.constant 0 : index
    %c0_11 = arith.constant 0 : index
    %31 = vector.load %arg3[%c0_10, %c0_11] : memref<50x242xf32, #tpu.memory_space<vmem>>, vector<50x242xf32>
    %cst_12 = arith.constant dense<0.000000e+00> : vector<50x128xf32>
    %32 = tpu.matmul %31, %30, %cst_12 {dimension_numbers = #tpu.dot_dimension_numbers<[1], [0], [0], [1], [0, 0, 1, 1], [], []>} : vector<50x242xf32>, vector<242x128xf32>, vector<50x128xf32> -> vector<50x128xf32>
    %c0_13 = arith.constant 0 : index
    %c0_14 = arith.constant 0 : index
    %33 = vector.load %arg4[%c0_13, %c0_14] : memref<50x128xf32, #tpu.memory_space<vmem>>, vector<50x128xf32>
    tpu.vector_store %arg4[%c0_13, %c0_14], %32 {strides = array<i32>} : memref<50x128xf32, #tpu.memory_space<vmem>>, vector<50x128xf32>,
    return
  }
}

</mosaic_0001>

<llo_original>
// kernel: net_forward.1
$region0: #{net_forward.1}
  #allocation0 [shape = 'u32[]', space=smem, size = 0x4, offset = 0x4, fixed_abs, tag = 'smem constant byte address 0x4 - core index']
  #allocation1 [shape = 'u32[144,128]{1,0:T(1,128)}', space=vmem, size = 0x12000, scoped, tag = 'internal scratch']
  %s0 = inlined_call_operand.vmem [shape: f32[242,128], index: 0, kind: input, shape index: {}]
  %s1 = inlined_call_operand.vmem [shape: bf16[128,128], index: 1, kind: input, shape index: {}]
  %s2 = inlined_call_operand.vmem [shape: bf16[128,128], index: 2, kind: input, shape index: {}]
  %s3 = inlined_call_operand.vmem [shape: f32[50,242], index: 3, kind: input, shape index: {}]
  %s4 = inlined_call_operand.vmem [shape: f32[50,128], index: 4, kind: output, shape index: {}]
  %s5 = sld [smem:[#allocation0]]
  $region26: #{net_forward.1} parent=0
    _
  %s7 = ssub.s32 1, %s5
  %s8 = scalar_select 0, %s7, %s5
  // Predicated region
  $region2: #{net_forward.1} parent=0 // pred_check
    _
  $region3: #{net_forward.1} parent=0 // pred_check_branch
    %10 = sbr.rel (0) target = $region5
  $region4: #{net_forward.1} parent=0 // pred_region
    _
  $region5: #{net_forward.1} parent=0 // pred_fallthru
    _
  // Predicated region
  $region6: #{net_forward.1} parent=0 // pred_check
    _
  $region7: #{net_forward.1} parent=0 // pred_check_branch
    %12 = sbr.rel (0) target = $region9
  $region8: #{net_forward.1} parent=0 // pred_region
    _
  $region9: #{net_forward.1} parent=0 // pred_fallthru
    _
  // Predicated region
  $region10: #{net_forward.1} parent=0 // pred_check
    _
  $region11: #{net_forward.1} parent=0 // pred_check_branch
    %14 = sbr.rel (0) target = $region13
  $region12: #{net_forward.1} parent=0 // pred_region
    _
  $region13: #{net_forward.1} parent=0 // pred_fallthru
    _
  // Predicated region
  $region14: #{net_forward.1} parent=0 // pred_check
    _
  $region15: #{net_forward.1} parent=0 // pred_check_branch
    %16 = sbr.rel (0) target = $region17
  $region16: #{net_forward.1} parent=0 // pred_region
    _
  $region17: #{net_forward.1} parent=0 // pred_fallthru
    _
  %v18 = vld [vmem:[%s0] sm:$0xff]
  %v19 = vld [vmem:[%s0 + $0x8] sm:$0xff]
  %v20 = vld [vmem:[%s0 + $0x10] sm:$0xff]
  %v21 = vld [vmem:[%s0 + $0x18] sm:$0xff]
  %v22 = vld [vmem:[%s0 + $0x20] sm:$0xff]
  %v23 = vld [vmem:[%s0 + $0x28] sm:$0xff]
  %v24 = vld [vmem:[%s0 + $0x30] sm:$0xff]
  %v25 = vld [vmem:[%s0 + $0x38] sm:$0xff]
  %v26 = vld [vmem:[%s0 + $0x40] sm:$0xff]
  %v27 = vld [vmem:[%s0 + $0x48] sm:$0xff]
  %v28 = vld [vmem:[%s0 + $0x50] sm:$0xff]
  %v29 = vld [vmem:[%s0 + $0x58] sm:$0xff]
  %v30 = vld [vmem:[%s0 + $0x60] sm:$0xff]
  %v31 = vld [vmem:[%s0 + $0x68] sm:$0xff]
  %v32 = vld [vmem:[%s0 + $0x70] sm:$0xff]
  %v33 = vld [vmem:[%s0 + $0x78] sm:$0xff]
  %v34 = vld [vmem:[%s0 + $0x80] sm:$0xff]
  %v35 = vld [vmem:[%s0 + $0x88] sm:$0xff]
  %v36 = vld [vmem:[%s0 + $0x90] sm:$0xff]
  %v37 = vld [vmem:[%s0 + $0x98] sm:$0xff]
  %v38 = vld [vmem:[%s0 + $0xa0] sm:$0xff]
  %v39 = vld [vmem:[%s0 + $0xa8] sm:$0xff]
  %v40 = vld [vmem:[%s0 + $0xb0] sm:$0xff]
  %v41 = vld [vmem:[%s0 + $0xb8] sm:$0xff]
  %v42 = vld [vmem:[%s0 + $0xc0] sm:$0xff]
  %v43 = vld [vmem:[%s0 + $0xc8] sm:$0xff]
  %v44 = vld [vmem:[%s0 + $0xd0] sm:$0xff]
  %v45 = vld [vmem:[%s0 + $0xd8] sm:$0xff]
  %v46 = vld [vmem:[%s0 + $0xe0] sm:$0xff]
  %v47 = vld [vmem:[%s0 + $0xe8] sm:$0xff]
  %v48 = vld [vmem:[%s0 + $0xf0] sm:$0x3]
  %v49 = vpack.c.bf16 %v19, %v18
  %v50 = vpack.c.bf16 %v21, %v20
  %v51 = vpack.c.bf16 %v23, %v22
  %v52 = vpack.c.bf16 %v25, %v24
  %v53 = vpack.c.bf16 %v27, %v26
  %v54 = vpack.c.bf16 %v29, %v28
  %v55 = vpack.c.bf16 %v31, %v30
  %v56 = vpack.c.bf16 %v33, %v32
  %v57 = vpack.c.bf16 %v35, %v34
  %v58 = vpack.c.bf16 %v37, %v36
  %v59 = vpack.c.bf16 %v39, %v38
  %v60 = vpack.c.bf16 %v41, %v40
  %v61 = vpack.c.bf16 %v43, %v42
  %v62 = vpack.c.bf16 %v45, %v44
  %v63 = vpack.c.bf16 %v47, %v46
  %v64 = vpack.c.bf16 %v48, %v48
  %v65 = vld [vmem:[%s1] sm:$0xf]
  %v66 = vld [vmem:[%s1 + $0x4] sm:$0xf]
  %v67 = vld [vmem:[%s1 + $0x8] sm:$0xf]
  %v68 = vld [vmem:[%s1 + $0xc] sm:$0xf]
  %v69 = vld [vmem:[%s1 + $0x10] sm:$0xf]
  %v70 = vld [vmem:[%s1 + $0x14] sm:$0xf]
  %v71 = vld [vmem:[%s1 + $0x18] sm:$0xf]
  %v72 = vld [vmem:[%s1 + $0x1c] sm:$0xf]
  %v73 = vld [vmem:[%s1 + $0x20] sm:$0xf]
  %v74 = vld [vmem:[%s1 + $0x24] sm:$0xf]
  %v75 = vld [vmem:[%s1 + $0x28] sm:$0xf]
  %v76 = vld [vmem:[%s1 + $0x2c] sm:$0xf]
  %v77 = vld [vmem:[%s1 + $0x30] sm:$0xf]
  %v78 = vld [vmem:[%s1 + $0x34] sm:$0xf]
  %v79 = vld [vmem:[%s1 + $0x38] sm:$0xf]
  %v80 = vld [vmem:[%s1 + $0x3c] sm:$0xf]
  %v97 = vunpack.c.l.b16 %v65
  %v98 = vunpack.c.l.b16 %v66
  %v99 = vunpack.c.l.b16 %v67
  %v100 = vunpack.c.l.b16 %v68
  %v101 = vunpack.c.l.b16 %v69
  %v102 = vunpack.c.l.b16 %v70
  %v103 = vunpack.c.l.b16 %v71
  %v104 = vunpack.c.l.b16 %v72
  %v105 = vunpack.c.l.b16 %v73
  %v106 = vunpack.c.l.b16 %v74
  %v107 = vunpack.c.l.b16 %v75
  %v108 = vunpack.c.l.b16 %v76
  %v109 = vunpack.c.l.b16 %v77
  %v110 = vunpack.c.l.b16 %v78
  %v111 = vunpack.c.l.b16 %v79
  %v112 = vunpack.c.l.b16 %v80
  %v113 = vpack.c.b16 %v98, %v97
  %v114 = vpack.c.b16 %v100, %v99
  %v115 = vpack.c.b16 %v102, %v101
  %v116 = vpack.c.b16 %v104, %v103
  %v117 = vpack.c.b16 %v106, %v105
  %v118 = vpack.c.b16 %v108, %v107
  %v119 = vpack.c.b16 %v110, %v109
  %v120 = vpack.c.b16 %v112, %v111
  %129 = vmatprep.subr.bf16.mxu0 0
  %130 = vmatpush1.bf16.msra.mxu0 %v113
  %131 = vmatprep.subr.bf16.mxu0 0
  %132 = vmatpush1.bf16.msra.mxu0 %v114
  %133 = vmatprep.subr.bf16.mxu0 0
  %134 = vmatpush1.bf16.msra.mxu0 %v115
  %135 = vmatprep.subr.bf16.mxu0 0
  %136 = vmatpush1.bf16.msra.mxu0 %v116
  %137 = vmatprep.subr.bf16.mxu0 0
  %138 = vmatpush1.bf16.msra.mxu0 %v117
  %139 = vmatprep.subr.bf16.mxu0 0
  %140 = vmatpush1.bf16.msra.mxu0 %v118
  %141 = vmatprep.subr.bf16.mxu0 0
  %142 = vmatpush1.bf16.msra.mxu0 %v119
  %143 = vmatprep.subr.bf16.mxu0 0
  %144 = vmatpush1.bf16.msra.mxu0 %v120
  %145 = vmatprep.subr.bf16.mxu0 0
  %146 = vmatpush1.bf16.msra.mxu0 0
  %147 = vmatprep.subr.bf16.mxu0 0
  %148 = vmatpush1.bf16.msra.mxu0 0
  %149 = vmatprep.subr.bf16.mxu0 0
  %150 = vmatpush1.bf16.msra.mxu0 0
  %151 = vmatprep.subr.bf16.mxu0 0
  %152 = vmatpush1.bf16.msra.mxu0 0
  %153 = vmatprep.subr.bf16.mxu0 0
  %154 = vmatpush1.bf16.msra.mxu0 0
  %155 = vmatprep.subr.bf16.mxu0 0
  %156 = vmatpush1.bf16.msra.mxu0 0
  %157 = vmatprep.subr.bf16.mxu0 0
  %158 = vmatpush1.bf16.msra.mxu0 0
  %159 = vmatprep.subr.bf16.mxu0 0
  %160 = vmatpush1.bf16.msra.mxu0 0
  %161 = vmatprep.mubr.bf16.mxu0 0
  %162 = vmatmul.mubr.bf16.gmra.mrb[0].mxu0 %v49
  %v163 = vpop.f32.mrb[0].mxu0
  %v164 = vadd.f32 0.0, %v163
  %v165 = vpop.f32.mrb[0].mxu0
  %v166 = vpop.f32.mrb[0].mxu0
  %v167 = vadd.f32 0.0, %v166
  %v168 = vpop.f32.mrb[0].mxu0
  %169 = vmatprep.mubr.bf16.mxu0 0
  %170 = vmatmul.mubr.bf16.gmra.mrb[0].mxu0 %v50
  %v171 = vpop.f32.mrb[0].mxu0
  %v172 = vadd.f32 0.0, %v171
  %v173 = vpop.f32.mrb[0].mxu0
  %v174 = vpop.f32.mrb[0].mxu0
  %v175 = vadd.f32 0.0, %v174
  %v176 = vpop.f32.mrb[0].mxu0
  %177 = vmatprep.mubr.bf16.mxu0 0
  %178 = vmatmul.mubr.bf16.gmra.mrb[0].mxu0 %v51
  %v179 = vpop.f32.mrb[0].mxu0
  %v180 = vadd.f32 0.0, %v179
  %v181 = vpop.f32.mrb[0].mxu0
  %v182 = vpop.f32.mrb[0].mxu0
  %v183 = vadd.f32 0.0, %v182
  %v184 = vpop.f32.mrb[0].mxu0
  %185 = vmatprep.mubr.bf16.mxu0 0
  %186 = vmatmul.mubr.bf16.gmra.mrb[0].mxu0 %v52
  %v187 = vpop.f32.mrb[0].mxu0
  %v188 = vadd.f32 0.0, %v187
  %v189 = vpop.f32.mrb[0].mxu0
  %v190 = vpop.f32.mrb[0].mxu0
  %v191 = vadd.f32 0.0, %v190
  %v192 = vpop.f32.mrb[0].mxu0
  %193 = vmatprep.mubr.bf16.mxu0 0
  %194 = vmatmul.mubr.bf16.gmra.mrb[0].mxu0 %v53
  %v195 = vpop.f32.mrb[0].mxu0
  %v196 = vadd.f32 0.0, %v195
  %v197 = vpop.f32.mrb[0].mxu0
  %v198 = vpop.f32.mrb[0].mxu0
  %v199 = vadd.f32 0.0, %v198
  %v200 = vpop.f32.mrb[0].mxu0
  %201 = vmatprep.mubr.bf16.mxu0 0
  %202 = vmatmul.mubr.bf16.gmra.mrb[0].mxu0 %v54
  %v203 = vpop.f32.mrb[0].mxu0
  %v204 = vadd.f32 0.0, %v203
  %v205 = vpop.f32.mrb[0].mxu0
  %v206 = vpop.f32.mrb[0].mxu0
  %v207 = vadd.f32 0.0, %v206
  %v208 = vpop.f32.mrb[0].mxu0
  %209 = vmatprep.mubr.bf16.mxu0 0
  %210 = vmatmul.mubr.bf16.gmra.mrb[0].mxu0 %v55
  %v211 = vpop.f32.mrb[0].mxu0
  %v212 = vadd.f32 0.0, %v211
  %v213 = vpop.f32.mrb[0].mxu0
  %v214 = vpop.f32.mrb[0].mxu0
  %v215 = vadd.f32 0.0, %v214
  %v216 = vpop.f32.mrb[0].mxu0
  %217 = vmatprep.mubr.bf16.mxu0 0
  %218 = vmatmul.mubr.bf16.gmra.mrb[0].mxu0 %v56
  %v219 = vpop.f32.mrb[0].mxu0
  %v220 = vadd.f32 0.0, %v219
  %v221 = vpop.f32.mrb[0].mxu0
  %v222 = vpop.f32.mrb[0].mxu0
  %v223 = vadd.f32 0.0, %v222
  %v224 = vpop.f32.mrb[0].mxu0
  %225 = vmatprep.mubr.bf16.mxu0 0
  %226 = vmatmul.mubr.bf16.gmra.mrb[0].mxu0 %v57
  %v227 = vpop.f32.mrb[0].mxu0
  %v228 = vadd.f32 0.0, %v227
  %v229 = vpop.f32.mrb[0].mxu0
  %v230 = vpop.f32.mrb[0].mxu0
  %v231 = vadd.f32 0.0, %v230
  %v232 = vpop.f32.mrb[0].mxu0
  %233 = vmatprep.mubr.bf16.mxu0 0
  %234 = vmatmul.mubr.bf16.gmra.mrb[0].mxu0 %v58
  %v235 = vpop.f32.mrb[0].mxu0
  %v236 = vadd.f32 0.0, %v235
  %v237 = vpop.f32.mrb[0].mxu0
  %v238 = vpop.f32.mrb[0].mxu0
  %v239 = vadd.f32 0.0, %v238
  %v240 = vpop.f32.mrb[0].mxu0
  %241 = vmatprep.mubr.bf16.mxu0 0
  %242 = vmatmul.mubr.bf16.gmra.mrb[0].mxu0 %v59
  %v243 = vpop.f32.mrb[0].mxu0
  %v244 = vadd.f32 0.0, %v243
  %v245 = vpop.f32.mrb[0].mxu0
  %v246 = vpop.f32.mrb[0].mxu0
  %v247 = vadd.f32 0.0, %v246
  %v248 = vpop.f32.mrb[0].mxu0
  %249 = vmatprep.mubr.bf16.mxu0 0
  %250 = vmatmul.mubr.bf16.gmra.mrb[0].mxu0 %v60
  %v251 = vpop.f32.mrb[0].mxu0
  %v252 = vadd.f32 0.0, %v251
  %v253 = vpop.f32.mrb[0].mxu0
  %v254 = vpop.f32.mrb[0].mxu0
  %v255 = vadd.f32 0.0, %v254
  %v256 = vpop.f32.mrb[0].mxu0
  %257 = vmatprep.mubr.bf16.mxu0 0
  %258 = vmatmul.mubr.bf16.gmra.mrb[0].mxu0 %v61
  %v259 = vpop.f32.mrb[0].mxu0
  %v260 = vadd.f32 0.0, %v259
  %v261 = vpop.f32.mrb[0].mxu0
  %v262 = vpop.f32.mrb[0].mxu0
  %v263 = vadd.f32 0.0, %v262
  %v264 = vpop.f32.mrb[0].mxu0
  %265 = vmatprep.mubr.bf16.mxu0 0
  %266 = vmatmul.mubr.bf16.gmra.mrb[0].mxu0 %v62
  %v267 = vpop.f32.mrb[0].mxu0
  %v268 = vadd.f32 0.0, %v267
  %v269 = vpop.f32.mrb[0].mxu0
  %v270 = vpop.f32.mrb[0].mxu0
  %v271 = vadd.f32 0.0, %v270
  %v272 = vpop.f32.mrb[0].mxu0
  %273 = vmatprep.mubr.bf16.mxu0 0
  %274 = vmatmul.mubr.bf16.gmra.mrb[0].mxu0 %v63
  %v275 = vpop.f32.mrb[0].mxu0
  %v276 = vadd.f32 0.0, %v275
  %v277 = vpop.f32.mrb[0].mxu0
  %v278 = vpop.f32.mrb[0].mxu0
  %v279 = vadd.f32 0.0, %v278
  %v280 = vpop.f32.mrb[0].mxu0
  %281 = vmatprep.mubr.bf16.mxu0 0
  %282 = vmatmul.mubr.bf16.gmra.mrb[0].mxu0 %v64
  %v283 = vpop.f32.mrb[0].mxu0
  %v284 = vadd.f32 0.0, %v283
  %v285 = vpop.f32.mrb[0].mxu0
  %v286 = vpop.f32.mrb[0].mxu0
  %v287 = vpop.f32.mrb[0].mxu0
  %288 = vdwg.mxu0
  %v289 = vmul.f32 %v164, %v164
  %v290 = vmul.f32 %v167, %v167
  %v291 = vmul.f32 %v172, %v172
  %v292 = vmul.f32 %v175, %v175
  %v293 = vmul.f32 %v180, %v180
  %v294 = vmul.f32 %v183, %v183
  %v295 = vmul.f32 %v188, %v188
  %v296 = vmul.f32 %v191, %v191
  %v297 = vmul.f32 %v196, %v196
  %v298 = vmul.f32 %v199, %v199
  %v299 = vmul.f32 %v204, %v204
  %v300 = vmul.f32 %v207, %v207
  %v301 = vmul.f32 %v212, %v212
  %v302 = vmul.f32 %v215, %v215
  %v303 = vmul.f32 %v220, %v220
  %v304 = vmul.f32 %v223, %v223
  %v305 = vmul.f32 %v228, %v228
  %v306 = vmul.f32 %v231, %v231
  %v307 = vmul.f32 %v236, %v236
  %v308 = vmul.f32 %v239, %v239
  %v309 = vmul.f32 %v244, %v244
  %v310 = vmul.f32 %v247, %v247
  %v311 = vmul.f32 %v252, %v252
  %v312 = vmul.f32 %v255, %v255
  %v313 = vmul.f32 %v260, %v260
  %v314 = vmul.f32 %v263, %v263
  %v315 = vmul.f32 %v268, %v268
  %v316 = vmul.f32 %v271, %v271
  %v317 = vmul.f32 %v276, %v276
  %v318 = vmul.f32 %v279, %v279
  %v319 = vmul.f32 %v284, %v284
  %320 = vadd.xlane.f32.xlu0 %v289
  %v321 = vpop.xlane.xlu0 %320
  %322 = vadd.xlane.f32.xlu0 %v290
  %v323 = vpop.xlane.xlu0 %322
  %324 = vadd.xlane.f32.xlu0 %v291
  %v325 = vpop.xlane.xlu0 %324
  %326 = vadd.xlane.f32.xlu0 %v292
  %v327 = vpop.xlane.xlu0 %326
  %328 = vadd.xlane.f32.xlu0 %v293
  %v329 = vpop.xlane.xlu0 %328
  %330 = vadd.xlane.f32.xlu0 %v294
  %v331 = vpop.xlane.xlu0 %330
  %332 = vadd.xlane.f32.xlu0 %v295
  %v333 = vpop.xlane.xlu0 %332
  %334 = vadd.xlane.f32.xlu0 %v296
  %v335 = vpop.xlane.xlu0 %334
  %336 = vadd.xlane.f32.xlu0 %v297
  %v337 = vpop.xlane.xlu0 %336
  %338 = vadd.xlane.f32.xlu0 %v298
  %v339 = vpop.xlane.xlu0 %338
  %340 = vadd.xlane.f32.xlu0 %v299
  %v341 = vpop.xlane.xlu0 %340
  %342 = vadd.xlane.f32.xlu0 %v300
  %v343 = vpop.xlane.xlu0 %342
  %344 = vadd.xlane.f32.xlu0 %v301
  %v345 = vpop.xlane.xlu0 %344
  %346 = vadd.xlane.f32.xlu0 %v302
  %v347 = vpop.xlane.xlu0 %346
  %348 = vadd.xlane.f32.xlu0 %v303
  %v349 = vpop.xlane.xlu0 %348
  %350 = vadd.xlane.f32.xlu0 %v304
  %v351 = vpop.xlane.xlu0 %350
  %352 = vadd.xlane.f32.xlu0 %v305
  %v353 = vpop.xlane.xlu0 %352
  %354 = vadd.xlane.f32.xlu0 %v306
  %v355 = vpop.xlane.xlu0 %354
  %356 = vadd.xlane.f32.xlu0 %v307
  %v357 = vpop.xlane.xlu0 %356
  %358 = vadd.xlane.f32.xlu0 %v308
  %v359 = vpop.xlane.xlu0 %358
  %360 = vadd.xlane.f32.xlu0 %v309
  %v361 = vpop.xlane.xlu0 %360
  %362 = vadd.xlane.f32.xlu0 %v310
  %v363 = vpop.xlane.xlu0 %362
  %364 = vadd.xlane.f32.xlu0 %v311
  %v365 = vpop.xlane.xlu0 %364
  %366 = vadd.xlane.f32.xlu0 %v312
  %v367 = vpop.xlane.xlu0 %366
  %368 = vadd.xlane.f32.xlu0 %v313
  %v369 = vpop.xlane.xlu0 %368
  %370 = vadd.xlane.f32.xlu0 %v314
  %v371 = vpop.xlane.xlu0 %370
  %372 = vadd.xlane.f32.xlu0 %v315
  %v373 = vpop.xlane.xlu0 %372
  %374 = vadd.xlane.f32.xlu0 %v316
  %v375 = vpop.xlane.xlu0 %374
  %376 = vadd.xlane.f32.xlu0 %v317
  %v377 = vpop.xlane.xlu0 %376
  %378 = vadd.xlane.f32.xlu0 %v318
  %v379 = vpop.xlane.xlu0 %378
  %vm380 = vcmask 1041408
  %v381 = vsel %vm380, %v319, 0.0
  %382 = vadd.xlane.f32.xlu0 %v381
  %v383 = vpop.xlane.xlu0 %382
  %v384 = vrsqrt.pop %v321
  %v385 = vrsqrt.pop %v323
  %v386 = vrsqrt.pop %v325
  %v387 = vrsqrt.pop %v327
  %v388 = vrsqrt.pop %v329
  %v389 = vrsqrt.pop %v331
  %v390 = vrsqrt.pop %v333
  %v391 = vrsqrt.pop %v335
  %v392 = vrsqrt.pop %v337
  %v393 = vrsqrt.pop %v339
  %v394 = vrsqrt.pop %v341
  %v395 = vrsqrt.pop %v343
  %v396 = vrsqrt.pop %v345
  %v397 = vrsqrt.pop %v347
  %v398 = vrsqrt.pop %v349
  %v399 = vrsqrt.pop %v351
  %v400 = vrsqrt.pop %v353
  %v401 = vrsqrt.pop %v355
  %v402 = vrsqrt.pop %v357
  %v403 = vrsqrt.pop %v359
  %v404 = vrsqrt.pop %v361
  %v405 = vrsqrt.pop %v363
  %v406 = vrsqrt.pop %v365
  %v407 = vrsqrt.pop %v367
  %v408 = vrsqrt.pop %v369
  %v409 = vrsqrt.pop %v371
  %v410 = vrsqrt.pop %v373
  %v411 = vrsqrt.pop %v375
  %v412 = vrsqrt.pop %v377
  %v413 = vrsqrt.pop %v379
  %v414 = vrsqrt.pop %v383
  %v415 = vmul.f32 %v164, %v384
  %v416 = vmul.f32 %v167, %v385
  %v417 = vmul.f32 %v172, %v386
  %v418 = vmul.f32 %v175, %v387
  %v419 = vmul.f32 %v180, %v388
  %v420 = vmul.f32 %v183, %v389
  %v421 = vmul.f32 %v188, %v390
  %v422 = vmul.f32 %v191, %v391
  %v423 = vmul.f32 %v196, %v392
  %v424 = vmul.f32 %v199, %v393
  %v425 = vmul.f32 %v204, %v394
  %v426 = vmul.f32 %v207, %v395
  %v427 = vmul.f32 %v212, %v396
  %v428 = vmul.f32 %v215, %v397
  %v429 = vmul.f32 %v220, %v398
  %v430 = vmul.f32 %v223, %v399
  %v431 = vmul.f32 %v228, %v400
  %v432 = vmul.f32 %v231, %v401
  %v433 = vmul.f32 %v236, %v402
  %v434 = vmul.f32 %v239, %v403
  %v435 = vmul.f32 %v244, %v404
  %v436 = vmul.f32 %v247, %v405
  %v437 = vmul.f32 %v252, %v406
  %v438 = vmul.f32 %v255, %v407
  %v439 = vmul.f32 %v260, %v408
  %v440 = vmul.f32 %v263, %v409
  %v441 = vmul.f32 %v268, %v410
  %v442 = vmul.f32 %v271, %v411
  %v443 = vmul.f32 %v276, %v412
  %v444 = vmul.f32 %v279, %v413
  %v445 = vmul.f32 %v284, %v414
  %v477 = vshra.s32 %v415, 13
  %v478 = vshra.s32 %v416, 13
  %v479 = vshra.s32 %v417, 13
  %v480 = vshra.s32 %v418, 13
  %v481 = vshra.s32 %v419, 13
  %v482 = vshra.s32 %v420, 13
  %v483 = vshra.s32 %v421, 13
  %v484 = vshra.s32 %v422, 13
  %v485 = vshra.s32 %v423, 13
  %v486 = vshra.s32 %v424, 13
  %v487 = vshra.s32 %v425, 13
  %v488 = vshra.s32 %v426, 13
  %v489 = vshra.s32 %v427, 13
  %v490 = vshra.s32 %v428, 13
  %v491 = vshra.s32 %v429, 13
  %v492 = vshra.s32 %v430, 13
  %v493 = vshra.s32 %v431, 13
  %v494 = vshra.s32 %v432, 13
  %v495 = vshra.s32 %v433, 13
  %v496 = vshra.s32 %v434, 13
  %v497 = vshra.s32 %v435, 13
  %v498 = vshra.s32 %v436, 13
  %v499 = vshra.s32 %v437, 13
  %v500 = vshra.s32 %v438, 13
  %v501 = vshra.s32 %v439, 13
  %v502 = vshra.s32 %v440, 13
  %v503 = vshra.s32 %v441, 13
  %v504 = vshra.s32 %v442, 13
  %v505 = vshra.s32 %v443, 13
  %v506 = vshra.s32 %v444, 13
  %v507 = vshra.s32 %v445, 13
  %v508 = vand.u32 %v477, 1
  %v509 = vand.u32 %v478, 1
  %v510 = vand.u32 %v479, 1
  %v511 = vand.u32 %v480, 1
  %v512 = vand.u32 %v481, 1
  %v513 = vand.u32 %v482, 1
  %v514 = vand.u32 %v483, 1
  %v515 = vand.u32 %v484, 1
  %v516 = vand.u32 %v485, 1
  %v517 = vand.u32 %v486, 1
  %v518 = vand.u32 %v487, 1
  %v519 = vand.u32 %v488, 1
  %v520 = vand.u32 %v489, 1
  %v521 = vand.u32 %v490, 1
  %v522 = vand.u32 %v491, 1
  %v523 = vand.u32 %v492, 1
  %v524 = vand.u32 %v493, 1
  %v525 = vand.u32 %v494, 1
  %v526 = vand.u32 %v495, 1
  %v527 = vand.u32 %v496, 1
  %v528 = vand.u32 %v497, 1
  %v529 = vand.u32 %v498, 1
  %v530 = vand.u32 %v499, 1
  %v531 = vand.u32 %v500, 1
  %v532 = vand.u32 %v501, 1
  %v533 = vand.u32 %v502, 1
  %v534 = vand.u32 %v503, 1
  %v535 = vand.u32 %v504, 1
  %v536 = vand.u32 %v505, 1
  %v537 = vand.u32 %v506, 1
  %v538 = vand.u32 %v507, 1
  %v539 = vadd.s32 %v415, 4095
  %v540 = vadd.s32 %v416, 4095
  %v541 = vadd.s32 %v417, 4095
  %v542 = vadd.s32 %v418, 4095
  %v543 = vadd.s32 %v419, 4095
  %v544 = vadd.s32 %v420, 4095
  %v545 = vadd.s32 %v421, 4095
  %v546 = vadd.s32 %v422, 4095
  %v547 = vadd.s32 %v423, 4095
  %v548 = vadd.s32 %v424, 4095
  %v549 = vadd.s32 %v425, 4095
  %v550 = vadd.s32 %v426, 4095
  %v551 = vadd.s32 %v427, 4095
  %v552 = vadd.s32 %v428, 4095
  %v553 = vadd.s32 %v429, 4095
  %v554 = vadd.s32 %v430, 4095
  %v555 = vadd.s32 %v431, 4095
  %v556 = vadd.s32 %v432, 4095
  %v557 = vadd.s32 %v433, 4095
  %v558 = vadd.s32 %v434, 4095
  %v559 = vadd.s32 %v435, 4095
  %v560 = vadd.s32 %v436, 4095
  %v561 = vadd.s32 %v437, 4095
  %v562 = vadd.s32 %v438, 4095
  %v563 = vadd.s32 %v439, 4095
  %v564 = vadd.s32 %v440, 4095
  %v565 = vadd.s32 %v441, 4095
  %v566 = vadd.s32 %v442, 4095
  %v567 = vadd.s32 %v443, 4095
  %v568 = vadd.s32 %v444, 4095
  %v569 = vadd.s32 %v445, 4095
  %v570 = vadd.s32 %v539, %v508
  %v571 = vadd.s32 %v540, %v509
  %v572 = vadd.s32 %v541, %v510
  %v573 = vadd.s32 %v542, %v511
  %v574 = vadd.s32 %v543, %v512
  %v575 = vadd.s32 %v544, %v513
  %v576 = vadd.s32 %v545, %v514
  %v577 = vadd.s32 %v546, %v515
  %v578 = vadd.s32 %v547, %v516
  %v579 = vadd.s32 %v548, %v517
  %v580 = vadd.s32 %v549, %v518
  %v581 = vadd.s32 %v550, %v519
  %v582 = vadd.s32 %v551, %v520
  %v583 = vadd.s32 %v552, %v521
  %v584 = vadd.s32 %v553, %v522
  %v585 = vadd.s32 %v554, %v523
  %v586 = vadd.s32 %v555, %v524
  %v587 = vadd.s32 %v556, %v525
  %v588 = vadd.s32 %v557, %v526
  %v589 = vadd.s32 %v558, %v527
  %v590 = vadd.s32 %v559, %v528
  %v591 = vadd.s32 %v560, %v529
  %v592 = vadd.s32 %v561, %v530
  %v593 = vadd.s32 %v562, %v531
  %v594 = vadd.s32 %v563, %v532
  %v595 = vadd.s32 %v564, %v533
  %v596 = vadd.s32 %v565, %v534
  %v597 = vadd.s32 %v566, %v535
  %v598 = vadd.s32 %v567, %v536
  %v599 = vadd.s32 %v568, %v537
  %v600 = vadd.s32 %v569, %v538
  %v601 = vand.u32 %v570, 4294959104
  %v602 = vand.u32 %v571, 4294959104
  %v603 = vand.u32 %v572, 4294959104
  %v604 = vand.u32 %v573, 4294959104
  %v605 = vand.u32 %v574, 4294959104
  %v606 = vand.u32 %v575, 4294959104
  %v607 = vand.u32 %v576, 4294959104
  %v608 = vand.u32 %v577, 4294959104
  %v609 = vand.u32 %v578, 4294959104
  %v610 = vand.u32 %v579, 4294959104
  %v611 = vand.u32 %v580, 4294959104
  %v612 = vand.u32 %v581, 4294959104
  %v613 = vand.u32 %v582, 4294959104
  %v614 = vand.u32 %v583, 4294959104
  %v615 = vand.u32 %v584, 4294959104
  %v616 = vand.u32 %v585, 4294959104
  %v617 = vand.u32 %v586, 4294959104
  %v618 = vand.u32 %v587, 4294959104
  %v619 = vand.u32 %v588, 4294959104
  %v620 = vand.u32 %v589, 4294959104
  %v621 = vand.u32 %v590, 4294959104
  %v622 = vand.u32 %v591, 4294959104
  %v623 = vand.u32 %v592, 4294959104
  %v624 = vand.u32 %v593, 4294959104
  %v625 = vand.u32 %v594, 4294959104
  %v626 = vand.u32 %v595, 4294959104
  %v627 = vand.u32 %v596, 4294959104
  %v628 = vand.u32 %v597, 4294959104
  %v629 = vand.u32 %v598, 4294959104
  %v630 = vand.u32 %v599, 4294959104
  %v631 = vand.u32 %v600, 4294959104
  %v663 = vpack.c.bf16 %v602, %v601
  %v664 = vpack.c.bf16 %v604, %v603
  %v665 = vpack.c.bf16 %v606, %v605
  %v666 = vpack.c.bf16 %v608, %v607
  %v667 = vpack.c.bf16 %v610, %v609
  %v668 = vpack.c.bf16 %v612, %v611
  %v669 = vpack.c.bf16 %v614, %v613
  %v670 = vpack.c.bf16 %v616, %v615
  %v671 = vpack.c.bf16 %v618, %v617
  %v672 = vpack.c.bf16 %v620, %v619
  %v673 = vpack.c.bf16 %v622, %v621
  %v674 = vpack.c.bf16 %v624, %v623
  %v675 = vpack.c.bf16 %v626, %v625
  %v676 = vpack.c.bf16 %v628, %v627
  %v677 = vpack.c.bf16 %v630, %v629
  %v678 = vpack.c.bf16 %v631, %v631
  %v679 = vld [vmem:[%s2] sm:$0xf]
  %v680 = vld [vmem:[%s2 + $0x4] sm:$0xf]
  %v681 = vld [vmem:[%s2 + $0x8] sm:$0xf]
  %v682 = vld [vmem:[%s2 + $0xc] sm:$0xf]
  %v683 = vld [vmem:[%s2 + $0x10] sm:$0xf]
  %v684 = vld [vmem:[%s2 + $0x14] sm:$0xf]
  %v685 = vld [vmem:[%s2 + $0x18] sm:$0xf]
  %v686 = vld [vmem:[%s2 + $0x1c] sm:$0xf]
  %v687 = vld [vmem:[%s2 + $0x20] sm:$0xf]
  %v688 = vld [vmem:[%s2 + $0x24] sm:$0xf]
  %v689 = vld [vmem:[%s2 + $0x28] sm:$0xf]
  %v690 = vld [vmem:[%s2 + $0x2c] sm:$0xf]
  %v691 = vld [vmem:[%s2 + $0x30] sm:$0xf]
  %v692 = vld [vmem:[%s2 + $0x34] sm:$0xf]
  %v693 = vld [vmem:[%s2 + $0x38] sm:$0xf]
  %v694 = vld [vmem:[%s2 + $0x3c] sm:$0xf]
  %v711 = vunpack.c.l.b16 %v679
  %v712 = vunpack.c.l.b16 %v680
  %v713 = vunpack.c.l.b16 %v681
  %v714 = vunpack.c.l.b16 %v682
  %v715 = vunpack.c.l.b16 %v683
  %v716 = vunpack.c.l.b16 %v684
  %v717 = vunpack.c.l.b16 %v685
  %v718 = vunpack.c.l.b16 %v686
  %v719 = vunpack.c.l.b16 %v687
  %v720 = vunpack.c.l.b16 %v688
  %v721 = vunpack.c.l.b16 %v689
  %v722 = vunpack.c.l.b16 %v690
  %v723 = vunpack.c.l.b16 %v691
  %v724 = vunpack.c.l.b16 %v692
  %v725 = vunpack.c.l.b16 %v693
  %v726 = vunpack.c.l.b16 %v694
  %v727 = vpack.c.b16 %v712, %v711
  %v728 = vpack.c.b16 %v714, %v713
  %v729 = vpack.c.b16 %v716, %v715
  %v730 = vpack.c.b16 %v718, %v717
  %v731 = vpack.c.b16 %v720, %v719
  %v732 = vpack.c.b16 %v722, %v721
  %v733 = vpack.c.b16 %v724, %v723
  %v734 = vpack.c.b16 %v726, %v725
  %743 = vmatprep.subr.bf16.mxu0 0
  %744 = vmatpush1.bf16.msra.mxu0 %v727
  %745 = vmatprep.subr.bf16.mxu0 0
  %746 = vmatpush1.bf16.msra.mxu0 %v728
  %747 = vmatprep.subr.bf16.mxu0 0
  %748 = vmatpush1.bf16.msra.mxu0 %v729
  %749 = vmatprep.subr.bf16.mxu0 0
  %750 = vmatpush1.bf16.msra.mxu0 %v730
  %751 = vmatprep.subr.bf16.mxu0 0
  %752 = vmatpush1.bf16.msra.mxu0 %v731
  %753 = vmatprep.subr.bf16.mxu0 0
  %754 = vmatpush1.bf16.msra.mxu0 %v732
  %755 = vmatprep.subr.bf16.mxu0 0
  %756 = vmatpush1.bf16.msra.mxu0 %v733
  %757 = vmatprep.subr.bf16.mxu0 0
  %758 = vmatpush1.bf16.msra.mxu0 %v734
  %759 = vmatprep.subr.bf16.mxu0 0
  %760 = vmatpush1.bf16.msra.mxu0 0
  %761 = vmatprep.subr.bf16.mxu0 0
  %762 = vmatpush1.bf16.msra.mxu0 0
  %763 = vmatprep.subr.bf16.mxu0 0
  %764 = vmatpush1.bf16.msra.mxu0 0
  %765 = vmatprep.subr.bf16.mxu0 0
  %766 = vmatpush1.bf16.msra.mxu0 0
  %767 = vmatprep.subr.bf16.mxu0 0
  %768 = vmatpush1.bf16.msra.mxu0 0
  %769 = vmatprep.subr.bf16.mxu0 0
  %770 = vmatpush1.bf16.msra.mxu0 0
  %771 = vmatprep.subr.bf16.mxu0 0
  %772 = vmatpush1.bf16.msra.mxu0 0
  %773 = vmatprep.subr.bf16.mxu0 0
  %774 = vmatpush1.bf16.msra.mxu0 0
  %775 = vmatprep.mubr.bf16.mxu0 0
  %776 = vmatmul.mubr.bf16.gmra.mrb[0].mxu0 %v663
  %v777 = vpop.f32.mrb[0].mxu0
  %v778 = vadd.f32 0.0, %v777
  %v779 = vpop.f32.mrb[0].mxu0
  %v780 = vpop.f32.mrb[0].mxu0
  %v781 = vadd.f32 0.0, %v780
  %v782 = vpop.f32.mrb[0].mxu0
  %783 = vmatprep.mubr.bf16.mxu0 0
  %784 = vmatmul.mubr.bf16.gmra.mrb[0].mxu0 %v664
  %v785 = vpop.f32.mrb[0].mxu0
  %v786 = vadd.f32 0.0, %v785
  %v787 = vpop.f32.mrb[0].mxu0
  %v788 = vpop.f32.mrb[0].mxu0
  %v789 = vadd.f32 0.0, %v788
  %v790 = vpop.f32.mrb[0].mxu0
  %791 = vmatprep.mubr.bf16.mxu0 0
  %792 = vmatmul.mubr.bf16.gmra.mrb[0].mxu0 %v665
  %v793 = vpop.f32.mrb[0].mxu0
  %v794 = vadd.f32 0.0, %v793
  %v795 = vpop.f32.mrb[0].mxu0
  %v796 = vpop.f32.mrb[0].mxu0
  %v797 = vadd.f32 0.0, %v796
  %v798 = vpop.f32.mrb[0].mxu0
  %799 = vmatprep.mubr.bf16.mxu0 0
  %800 = vmatmul.mubr.bf16.gmra.mrb[0].mxu0 %v666
  %v801 = vpop.f32.mrb[0].mxu0
  %v802 = vadd.f32 0.0, %v801
  %v803 = vpop.f32.mrb[0].mxu0
  %v804 = vpop.f32.mrb[0].mxu0
  %v805 = vadd.f32 0.0, %v804
  %v806 = vpop.f32.mrb[0].mxu0
  %807 = vmatprep.mubr.bf16.mxu0 0
  %808 = vmatmul.mubr.bf16.gmra.mrb[0].mxu0 %v667
  %v809 = vpop.f32.mrb[0].mxu0
  %v810 = vadd.f32 0.0, %v809
  %v811 = vpop.f32.mrb[0].mxu0
  %v812 = vpop.f32.mrb[0].mxu0
  %v813 = vadd.f32 0.0, %v812
  %v814 = vpop.f32.mrb[0].mxu0
  %815 = vmatprep.mubr.bf16.mxu0 0
  %816 = vmatmul.mubr.bf16.gmra.mrb[0].mxu0 %v668
  %v817 = vpop.f32.mrb[0].mxu0
  %v818 = vadd.f32 0.0, %v817
  %v819 = vpop.f32.mrb[0].mxu0
  %v820 = vpop.f32.mrb[0].mxu0
  %v821 = vadd.f32 0.0, %v820
  %v822 = vpop.f32.mrb[0].mxu0
  %823 = vmatprep.mubr.bf16.mxu0 0
  %824 = vmatmul.mubr.bf16.gmra.mrb[0].mxu0 %v669
  %v825 = vpop.f32.mrb[0].mxu0
  %v826 = vadd.f32 0.0, %v825
  %v827 = vpop.f32.mrb[0].mxu0
  %v828 = vpop.f32.mrb[0].mxu0
  %v829 = vadd.f32 0.0, %v828
  %v830 = vpop.f32.mrb[0].mxu0
  %831 = vmatprep.mubr.bf16.mxu0 0
  %832 = vmatmul.mubr.bf16.gmra.mrb[0].mxu0 %v670
  %v833 = vpop.f32.mrb[0].mxu0
  %v834 = vadd.f32 0.0, %v833
  %v835 = vpop.f32.mrb[0].mxu0
  %v836 = vpop.f32.mrb[0].mxu0
  %v837 = vadd.f32 0.0, %v836
  %v838 = vpop.f32.mrb[0].mxu0
  %839 = vmatprep.mubr.bf16.mxu0 0
  %840 = vmatmul.mubr.bf16.gmra.mrb[0].mxu0 %v671
  %v841 = vpop.f32.mrb[0].mxu0
  %v842 = vadd.f32 0.0, %v841
  %v843 = vpop.f32.mrb[0].mxu0
  %v844 = vpop.f32.mrb[0].mxu0
  %v845 = vadd.f32 0.0, %v844
  %v846 = vpop.f32.mrb[0].mxu0
  %847 = vmatprep.mubr.bf16.mxu0 0
  %848 = vmatmul.mubr.bf16.gmra.mrb[0].mxu0 %v672
  %v849 = vpop.f32.mrb[0].mxu0
  %v850 = vadd.f32 0.0, %v849
  %v851 = vpop.f32.mrb[0].mxu0
  %v852 = vpop.f32.mrb[0].mxu0
  %v853 = vadd.f32 0.0, %v852
  %v854 = vpop.f32.mrb[0].mxu0
  %855 = vmatprep.mubr.bf16.mxu0 0
  %856 = vmatmul.mubr.bf16.gmra.mrb[0].mxu0 %v673
  %v857 = vpop.f32.mrb[0].mxu0
  %v858 = vadd.f32 0.0, %v857
  %v859 = vpop.f32.mrb[0].mxu0
  %v860 = vpop.f32.mrb[0].mxu0
  %v861 = vadd.f32 0.0, %v860
  %v862 = vpop.f32.mrb[0].mxu0
  %863 = vmatprep.mubr.bf16.mxu0 0
  %864 = vmatmul.mubr.bf16.gmra.mrb[0].mxu0 %v674
  %v865 = vpop.f32.mrb[0].mxu0
  %v866 = vadd.f32 0.0, %v865
  %v867 = vpop.f32.mrb[0].mxu0
  %v868 = vpop.f32.mrb[0].mxu0
  %v869 = vadd.f32 0.0, %v868
  %v870 = vpop.f32.mrb[0].mxu0
  %871 = vmatprep.mubr.bf16.mxu0 0
  %872 = vmatmul.mubr.bf16.gmra.mrb[0].mxu0 %v675
  %v873 = vpop.f32.mrb[0].mxu0
  %v874 = vadd.f32 0.0, %v873
  %v875 = vpop.f32.mrb[0].mxu0
  %v876 = vpop.f32.mrb[0].mxu0
  %v877 = vadd.f32 0.0, %v876
  %v878 = vpop.f32.mrb[0].mxu0
  %879 = vmatprep.mubr.bf16.mxu0 0
  %880 = vmatmul.mubr.bf16.gmra.mrb[0].mxu0 %v676
  %v881 = vpop.f32.mrb[0].mxu0
  %v882 = vadd.f32 0.0, %v881
  %v883 = vpop.f32.mrb[0].mxu0
  %v884 = vpop.f32.mrb[0].mxu0
  %v885 = vadd.f32 0.0, %v884
  %v886 = vpop.f32.mrb[0].mxu0
  %887 = vmatprep.mubr.bf16.mxu0 0
  %888 = vmatmul.mubr.bf16.gmra.mrb[0].mxu0 %v677
  %v889 = vpop.f32.mrb[0].mxu0
  %v890 = vadd.f32 0.0, %v889
  %v891 = vpop.f32.mrb[0].mxu0
  %v892 = vpop.f32.mrb[0].mxu0
  %v893 = vadd.f32 0.0, %v892
  %v894 = vpop.f32.mrb[0].mxu0
  %895 = vmatprep.mubr.bf16.mxu0 0
  %896 = vmatmul.mubr.bf16.gmra.mrb[0].mxu0 %v678
  %v897 = vpop.f32.mrb[0].mxu0
  %v898 = vadd.f32 0.0, %v897
  %v899 = vpop.f32.mrb[0].mxu0
  %v900 = vpop.f32.mrb[0].mxu0
  %v901 = vpop.f32.mrb[0].mxu0
  %902 = vdwg.mxu0
  %v903 = vmax.f32 %v778, -1.0
  %v904 = vmax.f32 %v781, -1.0
  %v905 = vmax.f32 %v786, -1.0
  %v906 = vmax.f32 %v789, -1.0
  %v907 = vmax.f32 %v794, -1.0
  %v908 = vmax.f32 %v797, -1.0
  %v909 = vmax.f32 %v802, -1.0
  %v910 = vmax.f32 %v805, -1.0
  %v911 = vmax.f32 %v810, -1.0
  %v912 = vmax.f32 %v813, -1.0
  %v913 = vmax.f32 %v818, -1.0
  %v914 = vmax.f32 %v821, -1.0
  %v915 = vmax.f32 %v826, -1.0
  %v916 = vmax.f32 %v829, -1.0
  %v917 = vmax.f32 %v834, -1.0
  %v918 = vmax.f32 %v837, -1.0
  %v919 = vmax.f32 %v842, -1.0
  %v920 = vmax.f32 %v845, -1.0
  %v921 = vmax.f32 %v850, -1.0
  %v922 = vmax.f32 %v853, -1.0
  %v923 = vmax.f32 %v858, -1.0
  %v924 = vmax.f32 %v861, -1.0
  %v925 = vmax.f32 %v866, -1.0
  %v926 = vmax.f32 %v869, -1.0
  %v927 = vmax.f32 %v874, -1.0
  %v928 = vmax.f32 %v877, -1.0
  %v929 = vmax.f32 %v882, -1.0
  %v930 = vmax.f32 %v885, -1.0
  %v931 = vmax.f32 %v890, -1.0
  %v932 = vmax.f32 %v893, -1.0
  %v933 = vmax.f32 %v898, -1.0
  %v934 = vmin.f32 %v903, 1.0
  %v935 = vmin.f32 %v904, 1.0
  %v936 = vmin.f32 %v905, 1.0
  %v937 = vmin.f32 %v906, 1.0
  %v938 = vmin.f32 %v907, 1.0
  %v939 = vmin.f32 %v908, 1.0
  %v940 = vmin.f32 %v909, 1.0
  %v941 = vmin.f32 %v910, 1.0
  %v942 = vmin.f32 %v911, 1.0
  %v943 = vmin.f32 %v912, 1.0
  %v944 = vmin.f32 %v913, 1.0
  %v945 = vmin.f32 %v914, 1.0
  %v946 = vmin.f32 %v915, 1.0
  %v947 = vmin.f32 %v916, 1.0
  %v948 = vmin.f32 %v917, 1.0
  %v949 = vmin.f32 %v918, 1.0
  %v950 = vmin.f32 %v919, 1.0
  %v951 = vmin.f32 %v920, 1.0
  %v952 = vmin.f32 %v921, 1.0
  %v953 = vmin.f32 %v922, 1.0
  %v954 = vmin.f32 %v923, 1.0
  %v955 = vmin.f32 %v924, 1.0
  %v956 = vmin.f32 %v925, 1.0
  %v957 = vmin.f32 %v926, 1.0
  %v958 = vmin.f32 %v927, 1.0
  %v959 = vmin.f32 %v928, 1.0
  %v960 = vmin.f32 %v929, 1.0
  %v961 = vmin.f32 %v930, 1.0
  %v962 = vmin.f32 %v931, 1.0
  %v963 = vmin.f32 %v932, 1.0
  %v964 = vmin.f32 %v933, 1.0
  %v965 = vsub.f32 %v778, %v934
  %v966 = vsub.f32 %v781, %v935
  %v967 = vsub.f32 %v786, %v936
  %v968 = vsub.f32 %v789, %v937
  %v969 = vsub.f32 %v794, %v938
  %v970 = vsub.f32 %v797, %v939
  %v971 = vsub.f32 %v802, %v940
  %v972 = vsub.f32 %v805, %v941
  %v973 = vsub.f32 %v810, %v942
  %v974 = vsub.f32 %v813, %v943
  %v975 = vsub.f32 %v818, %v944
  %v976 = vsub.f32 %v821, %v945
  %v977 = vsub.f32 %v826, %v946
  %v978 = vsub.f32 %v829, %v947
  %v979 = vsub.f32 %v834, %v948
  %v980 = vsub.f32 %v837, %v949
  %v981 = vsub.f32 %v842, %v950
  %v982 = vsub.f32 %v845, %v951
  %v983 = vsub.f32 %v850, %v952
  %v984 = vsub.f32 %v853, %v953
  %v985 = vsub.f32 %v858, %v954
  %v986 = vsub.f32 %v861, %v955
  %v987 = vsub.f32 %v866, %v956
  %v988 = vsub.f32 %v869, %v957
  %v989 = vsub.f32 %v874, %v958
  %v990 = vsub.f32 %v877, %v959
  %v991 = vsub.f32 %v882, %v960
  %v992 = vsub.f32 %v885, %v961
  %v993 = vsub.f32 %v890, %v962
  %v994 = vsub.f32 %v893, %v963
  %v995 = vsub.f32 %v898, %v964
  %v996 = vmax.f32 %v965, 0.0
  %v997 = vmax.f32 %v966, 0.0
  %v998 = vmax.f32 %v967, 0.0
  %v999 = vmax.f32 %v968, 0.0
  %v1000 = vmax.f32 %v969, 0.0
  %v1001 = vmax.f32 %v970, 0.0
  %v1002 = vmax.f32 %v971, 0.0
  %v1003 = vmax.f32 %v972, 0.0
  %v1004 = vmax.f32 %v973, 0.0
  %v1005 = vmax.f32 %v974, 0.0
  %v1006 = vmax.f32 %v975, 0.0
  %v1007 = vmax.f32 %v976, 0.0
  %v1008 = vmax.f32 %v977, 0.0
  %v1009 = vmax.f32 %v978, 0.0
  %v1010 = vmax.f32 %v979, 0.0
  %v1011 = vmax.f32 %v980, 0.0
  %v1012 = vmax.f32 %v981, 0.0
  %v1013 = vmax.f32 %v982, 0.0
  %v1014 = vmax.f32 %v983, 0.0
  %v1015 = vmax.f32 %v984, 0.0
  %v1016 = vmax.f32 %v985, 0.0
  %v1017 = vmax.f32 %v986, 0.0
  %v1018 = vmax.f32 %v987, 0.0
  %v1019 = vmax.f32 %v988, 0.0
  %v1020 = vmax.f32 %v989, 0.0
  %v1021 = vmax.f32 %v990, 0.0
  %v1022 = vmax.f32 %v991, 0.0
  %v1023 = vmax.f32 %v992, 0.0
  %v1024 = vmax.f32 %v993, 0.0
  %v1025 = vmax.f32 %v994, 0.0
  %v1026 = vmax.f32 %v995, 0.0
  %v1027 = vld [vmem:[%s3] sm:$0xff]
  %v1028 = vld [vmem:[%s3 + $0x8] sm:$0xff]
  %v1029 = vld [vmem:[%s3 + $0x10] sm:$0xff]
  %v1030 = vld [vmem:[%s3 + $0x18] sm:$0xff]
  %v1031 = vld [vmem:[%s3 + $0x20] sm:$0xff]
  %v1032 = vld [vmem:[%s3 + $0x28] sm:$0xff]
  %v1033 = vld [vmem:[%s3 + $0x30] sm:$0xff]
  %v1034 = vld [vmem:[%s3 + $0x38] sm:$0xff]
  %v1035 = vld [vmem:[%s3 + $0x40] sm:$0xff]
  %v1036 = vld [vmem:[%s3 + $0x48] sm:$0xff]
  %v1037 = vld [vmem:[%s3 + $0x50] sm:$0xff]
  %v1038 = vld [vmem:[%s3 + $0x58] sm:$0xff]
  %v1039 = vld [vmem:[%s3 + $0x60] sm:$0x3]
  %v1040 = vld [vmem:[%s3 + $0x68] sm:$0x3]
  %vm1041 = vcmask 932864
  %v1043 = vsel %vm1041, %v1028, 0
  %v1046 = vsel %vm1041, %v1030, 0
  %v1049 = vsel %vm1041, %v1032, 0
  %v1052 = vsel %vm1041, %v1034, 0
  %v1055 = vsel %vm1041, %v1036, 0
  %v1058 = vsel %vm1041, %v1038, 0
  %v1061 = vsel %vm1041, %v1040, 0
  %v1064 = vsel %vm380, %v1026, 0
  %1066 = vmatprep.subr.mxu0 0.0
  %1067 = vmatpush1.msra.mxu0 %v996
  %1068 = vmatprep.subr.mxu0 0.0
  %1069 = vmatpush1.msra.mxu0 %v997
  %1070 = vmatprep.subr.mxu0 0.0
  %1071 = vmatpush1.msra.mxu0 %v998
  %1072 = vmatprep.subr.mxu0 0.0
  %1073 = vmatpush1.msra.mxu0 %v999
  %1074 = vmatprep.subr.mxu0 0.0
  %1075 = vmatpush1.msra.mxu0 %v1000
  %1076 = vmatprep.subr.mxu0 0.0
  %1077 = vmatpush1.msra.mxu0 %v1001
  %1078 = vmatprep.subr.mxu0 0.0
  %1079 = vmatpush1.msra.mxu0 %v1002
  %1080 = vmatprep.subr.mxu0 0.0
  %1081 = vmatpush1.msra.mxu0 %v1003
  %1082 = vmatprep.subr.mxu0 0.0
  %1083 = vmatpush1.msra.mxu0 %v1004
  %1084 = vmatprep.subr.mxu0 0.0
  %1085 = vmatpush1.msra.mxu0 %v1005
  %1086 = vmatprep.subr.mxu0 0.0
  %1087 = vmatpush1.msra.mxu0 %v1006
  %1088 = vmatprep.subr.mxu0 0.0
  %1089 = vmatpush1.msra.mxu0 %v1007
  %1090 = vmatprep.subr.mxu0 0.0
  %1091 = vmatpush1.msra.mxu0 %v1008
  %1092 = vmatprep.subr.mxu0 0.0
  %1093 = vmatpush1.msra.mxu0 %v1009
  %1094 = vmatprep.subr.mxu0 0.0
  %1095 = vmatpush1.msra.mxu0 %v1010
  %1096 = vmatprep.subr.mxu0 0.0
  %1097 = vmatpush1.msra.mxu0 %v1011
  %1098 = vmatprep.subr.mxu0 0.0
  %1099 = vmatpush1.msra.mxu0 %v1012
  %1100 = vmatprep.subr.mxu0 0.0
  %1101 = vmatpush1.msra.mxu0 %v1013
  %1102 = vmatprep.subr.mxu0 0.0
  %1103 = vmatpush1.msra.mxu0 %v1014
  %1104 = vmatprep.subr.mxu0 0.0
  %1105 = vmatpush1.msra.mxu0 %v1015
  %1106 = vmatprep.subr.mxu0 0.0
  %1107 = vmatpush1.msra.mxu0 %v1016
  %1108 = vmatprep.subr.mxu0 0.0
  %1109 = vmatpush1.msra.mxu0 %v1017
  %1110 = vmatprep.subr.mxu0 0.0
  %1111 = vmatpush1.msra.mxu0 %v1018
  %1112 = vmatprep.subr.mxu0 0.0
  %1113 = vmatpush1.msra.mxu0 %v1019
  %1114 = vmatprep.subr.mxu0 0.0
  %1115 = vmatpush1.msra.mxu0 %v1020
  %1116 = vmatprep.subr.mxu0 0.0
  %1117 = vmatpush1.msra.mxu0 %v1021
  %1118 = vmatprep.subr.mxu0 0.0
  %1119 = vmatpush1.msra.mxu0 %v1022
  %1120 = vmatprep.subr.mxu0 0.0
  %1121 = vmatpush1.msra.mxu0 %v1023
  %1122 = vmatprep.subr.mxu0 0.0
  %1123 = vmatpush1.msra.mxu0 %v1024
  %1124 = vmatprep.subr.mxu0 0.0
  %1125 = vmatpush1.msra.mxu0 %v1025
  %1126 = vmatprep.subr.mxu0 0.0
  %1127 = vmatpush1.msra.mxu0 %v1064
  %1128 = vmatprep.subr.mxu0 0.0
  %1129 = vmatpush1.msra.mxu0 0.0
  %1130 = vmatprep.mubr.f32.mxu0 %v1043
  %1131 = vmatmul.mubr.f32.gmra.mrb[0].mxu0 %v1027
  %v1132 = vpop.f32.mrb[0].mxu0
  %v1133 = vadd.f32 0.0, %v1132
  %v1134 = vpop.f32.mrb[0].mxu0
  %1135 = vmatprep.mubr.f32.mxu0 %v1046
  %1136 = vmatmul.mubr.f32.gmra.mrb[0].mxu0 %v1029
  %v1137 = vpop.f32.mrb[0].mxu0
  %v1138 = vadd.f32 0.0, %v1137
  %v1139 = vpop.f32.mrb[0].mxu0
  %1140 = vmatprep.mubr.f32.mxu0 %v1049
  %1141 = vmatmul.mubr.f32.gmra.mrb[0].mxu0 %v1031
  %v1142 = vpop.f32.mrb[0].mxu0
  %v1143 = vadd.f32 0.0, %v1142
  %v1144 = vpop.f32.mrb[0].mxu0
  %1145 = vmatprep.mubr.f32.mxu0 %v1052
  %1146 = vmatmul.mubr.f32.gmra.mrb[0].mxu0 %v1033
  %v1147 = vpop.f32.mrb[0].mxu0
  %v1148 = vadd.f32 0.0, %v1147
  %v1149 = vpop.f32.mrb[0].mxu0
  %1150 = vmatprep.mubr.f32.mxu0 %v1055
  %1151 = vmatmul.mubr.f32.gmra.mrb[0].mxu0 %v1035
  %v1152 = vpop.f32.mrb[0].mxu0
  %v1153 = vadd.f32 0.0, %v1152
  %v1154 = vpop.f32.mrb[0].mxu0
  %1155 = vmatprep.mubr.f32.mxu0 %v1058
  %1156 = vmatmul.mubr.f32.gmra.mrb[0].mxu0 %v1037
  %v1157 = vpop.f32.mrb[0].mxu0
  %v1158 = vadd.f32 0.0, %v1157
  %v1159 = vpop.f32.mrb[0].mxu0
  %1160 = vmatprep.mubr.f32.mxu0 %v1061
  %1161 = vmatmul.mubr.f32.gmra.mrb[0].mxu0 %v1039
  %v1162 = vpop.f32.mrb[0].mxu0
  %v1163 = vadd.f32 0.0, %v1162
  %v1164 = vpop.f32.mrb[0].mxu0
  %1165 = vdwg.mxu0
  %1166 = vst [vmem:[%s4] sm:$0xff] %v1133
  %1167 = vst [vmem:[%s4 + $0x8] sm:$0xff] %v1138
  %1168 = vst [vmem:[%s4 + $0x10] sm:$0xff] %v1143
  %1169 = vst [vmem:[%s4 + $0x18] sm:$0xff] %v1148
  %1170 = vst [vmem:[%s4 + $0x20] sm:$0xff] %v1153
  %1171 = vst [vmem:[%s4 + $0x28] sm:$0xff] %v1158
  %1172 = vst [vmem:[%s4 + $0x30] sm:$0x3] %v1163
  // Predicated region
  $region18: #{net_forward.1} parent=0 // pred_check
    _
  $region19: #{net_forward.1} parent=0 // pred_check_branch
    %1174 = sbr.rel (0) target = $region21
  $region20: #{net_forward.1} parent=0 // pred_region
    _
  $region21: #{net_forward.1} parent=0 // pred_fallthru
    _
  // Predicated region
  $region22: #{net_forward.1} parent=0 // pred_check
    _
  $region23: #{net_forward.1} parent=0 // pred_check_branch
    %1176 = sbr.rel (0) target = $region25
  $region24: #{net_forward.1} parent=0 // pred_region
    _
  $region25: #{net_forward.1} parent=0 // pred_fallthru
    _

</llo_original>
